<compile_context>
chip_gen: v7x
topology: tpu7x:2x2x1
jax: 0.10.0
libtpu: 0.0.40
codegen_flags: <defaults>
</compile_context>

<pallas_src>
import functools

import jax
import jax.numpy as jnp
from jax import lax
from jax.experimental import pallas as pl
from jax.experimental.pallas import tpu as pltpu


def _round_up(x: int, m: int) -> int:
    return ((x + m - 1) // m) * m


def _vmem_limit_bytes(tile: int, D: int, E: int, k: int) -> int:
    """Explicit VMEM budget: double-buffered x tile, resident W/b, outputs."""
    x_bytes = 2 * tile * D * 4            # double-buffered input tile
    w_bytes = D * E * 4 + E * 4           # resident weight + bias
    o_bytes = 2 * (E + k) * tile * 4      # double-buffered gates + idx tiles
    need = x_bytes + w_bytes + o_bytes + (8 << 20)   # headroom / scratch
    # Floor at the common 32 MiB scoped default; cap well inside v7x's 64 MiB.
    return int(min(max(need, 32 << 20), 48 << 20))


def _router_kernel(x_ref, w_ref, b_ref, gates_ref, idx_ref, *, k: int):
    """One token tile of the router, expert-major after the matmul.

    x_ref     : [tile, D]   input tokens
    w_ref     : [D,   E]    gate weight (transposed vs torch)
    b_ref     : [E,   1]    gate bias (column vector)
    gates_ref : [E, tile]   output: dense routing weights (zeros off top-k)
    idx_ref   : [k, tile]   output: top-k expert indices (descending by logit)
    """
    x = x_ref[...]
    w = w_ref[...]

    # gate_logits = x @ W   -> [tile, E] on the MXU, then one small XLU
    # transpose into the expert-major, lane-dense layout [E, tile].
    logits = jnp.dot(x, w, preferred_element_type=jnp.float32)
    logits_t = logits.T + b_ref[...]                       # [E, tile]

    E, tile = logits_t.shape
    row_ids = lax.broadcasted_iota(jnp.int32, (E, tile), 0)
    neg_inf = jnp.float32(-jnp.inf)

    # Iterative top-k over the (small, static) expert axis: max -> record ->
    # mask -> repeat.  Ties resolve to the lowest expert index (lax.top_k).
    work = logits_t
    vals = []   # k x [1, tile]
    idxs = []   # k x [1, tile]
    for _ in range(k):
        m = jnp.max(work, axis=0, keepdims=True)                      # [1, tile]
        is_max = work == m
        idx = jnp.min(jnp.where(is_max, row_ids, E), axis=0,
                      keepdims=True)                                  # [1, tile]
        vals.append(m)
        idxs.append(idx)
        work = jnp.where(row_ids == idx, neg_inf, work)

    v = jnp.concatenate(vals, axis=0)                                 # [k, tile]
    # Softmax over the k selected logits; row 0 holds the max -> stable.
    p = jnp.exp(v - vals[0])
    p = p / jnp.sum(p, axis=0, keepdims=True)                         # [k, tile]

    # Dense scatter back to [E, tile] with a single select chain (the k
    # selected indices per token are distinct by construction).
    full = jnp.zeros((E, tile), jnp.float32)
    for i in range(k):
        full = jnp.where(row_ids == idxs[i], p[i:i + 1, :], full)

    gates_ref[...] = full
    idx_ref[...] = jnp.concatenate(idxs, axis=0)


def noisy_topk_router(x, w, b, k, *, token_tile=512):
    """x: [B, N, D], w: [D, E], b: [E].  Returns (gates [B,N,E], idx [B,N,k])."""
    B, N, D = x.shape
    E = w.shape[1]
    T = B * N

    # Lane-dense token tile (multiple of 128); shrink to one tile for tiny T.
    token_tile = max(128, _round_up(token_tile, 128))
    tile = min(token_tile, _round_up(T, 128))
    T_pad = _round_up(T, tile)

    x2 = x.reshape(T, D)
    if T_pad != T:
        x2 = jnp.pad(x2, ((0, T_pad - T), (0, 0)))
    b2 = b.reshape(E, 1)

    kernel = functools.partial(_router_kernel, k=k)
    gates_t, idx_t = pl.pallas_call(
        kernel,
        out_shape=(
            jax.ShapeDtypeStruct((E, T_pad), jnp.float32),
            jax.ShapeDtypeStruct((k, T_pad), jnp.int32),
        ),
        grid_spec=pltpu.PrefetchScalarGridSpec(
            num_scalar_prefetch=0,
            grid=(T_pad // tile,),
            in_specs=[
                pl.BlockSpec((tile, D), lambda i: (i, 0)),   # streamed tokens
                pl.BlockSpec((D, E), lambda i: (0, 0)),      # resident weight
                pl.BlockSpec((E, 1), lambda i: (0, 0)),      # resident bias
            ],
            out_specs=[
                pl.BlockSpec((E, tile), lambda i: (0, i)),   # lane-dense gates
                pl.BlockSpec((k, tile), lambda i: (0, i)),   # lane-dense idx
            ],
        ),
        compiler_params=pltpu.CompilerParams(
            dimension_semantics=("parallel",),
            vmem_limit_bytes=_vmem_limit_bytes(tile, D, E, k)),
    )(x2, w, b2)

    # Back to torch layout; drop token padding.
    gates = gates_t.T[:T].reshape(B, N, E)
    idx = idx_t.T[:T].reshape(B, N, k)
    return gates, idx


def _reference(x, w, b, k):
    """Plain-JAX reference matching torch semantics."""
    logits = jnp.einsum("bnd,de->bne", x, w) + b
    vals, idx = lax.top_k(logits, k)
    p = jax.nn.softmax(vals, axis=-1)
    full = jnp.zeros_like(logits)
    full = jnp.put_along_axis(full, idx, p, axis=-1, inplace=False)
    return full, idx


if __name__ == "__main__":
    # Module hyperparameters (deterministic, synthetic).
    B, N, D = 2, 8, 32        # batch, tokens per batch, input_dim
    E, K = 8, 2               # num_experts, top-k

    key = jax.random.PRNGKey(0)
    kx, kw, kb = jax.random.split(key, 3)
    x = jax.random.normal(kx, (B, N, D), dtype=jnp.float32)
    # nn.Linear(input_dim, num_experts): weight [E, D], bias [E].
    # Stored here pre-transposed as [D, E].
    w = jax.random.normal(kw, (D, E), dtype=jnp.float32) * 0.1
    b = jax.random.normal(kb, (E,), dtype=jnp.float32) * 0.1

    gates, idx = noisy_topk_router(x, w, b, K)
    jax.block_until_ready((gates, idx))

    ref_gates, ref_idx = _reference(x, w, b, K)
    assert jnp.allclose(gates, ref_gates, atol=1e-5, rtol=1e-5)
    assert jnp.array_equal(idx, ref_idx.astype(jnp.int32))

    print("KERNEL_OK")
</pallas_src>

<mosaic_0001>
module attributes {stable_mosaic.version = 11 : i64} {
  func.func @_router_kernel(%arg0: i32, %arg1: memref<128x32xf32, #tpu.memory_space<vmem>>, %arg2: memref<32x8xf32, #tpu.memory_space<vmem>>, %arg3: memref<8x1xf32, #tpu.memory_space<vmem>>, %arg4: memref<8x128xf32, #tpu.memory_space<vmem>>, %arg5: memref<2x128xi32, #tpu.memory_space<vmem>>) attributes {dimension_semantics = [#tpu.dimension_semantics<parallel>], iteration_bounds = array<i64: 1>, scalar_prefetch = 0 : i64, scratch_operands = 0 : i64, tpu.core_type = #tpu.core_type<tc>, window_params = [{transform_indices = @transform_0, window_bounds = array<i64: 128, 32>}, {pipeline_mode = #tpu.pipeline_mode<synchronous>, transform_indices = @transform_1, window_bounds = array<i64: 32, 8>}, {pipeline_mode = #tpu.pipeline_mode<synchronous>, transform_indices = @transform_2, window_bounds = array<i64: 8, 1>}, {transform_indices = @transform_3, window_bounds = array<i64: 8, 128>}, {transform_indices = @transform_4, window_bounds = array<i64: 2, 128>}]} {
    %c0 = arith.constant 0 : index
    %c0_0 = arith.constant 0 : index
    %0 = vector.load %arg1[%c0, %c0_0] : memref<128x32xf32, #tpu.memory_space<vmem>>, vector<128x32xf32>
    %c0_1 = arith.constant 0 : index
    %c0_2 = arith.constant 0 : index
    %1 = vector.load %arg2[%c0_1, %c0_2] : memref<32x8xf32, #tpu.memory_space<vmem>>, vector<32x8xf32>
    %cst = arith.constant dense<0.000000e+00> : vector<128x8xf32>
    %2 = tpu.matmul %0, %1, %cst {dimension_numbers = #tpu.dot_dimension_numbers<[1], [0], [0], [1], [0, 0, 1, 1], [], []>} : vector<128x32xf32>, vector<32x8xf32>, vector<128x8xf32> -> vector<128x8xf32>
    %3 = tpu.transpose %2, [1, 0] : vector<128x8xf32> -> vector<8x128xf32>
    %c0_3 = arith.constant 0 : index
    %c0_4 = arith.constant 0 : index
    %4 = vector.load %arg3[%c0_3, %c0_4] : memref<8x1xf32, #tpu.memory_space<vmem>>, vector<8x1xf32>
    %5 = vector.broadcast %4 : vector<8x1xf32> to vector<8x128xf32>
    %6 = arith.addf %3, %5 : vector<8x128xf32>
    %7 = tpu.iota {dimensions = array<i32: 0>} : vector<8x128xi32>
    %cst_5 = arith.constant dense<0xFF800000> : vector<128xf32>
    %8 = vector.multi_reduction <maximumf>, %6, %cst_5 [0] : vector<8x128xf32> to vector<128xf32>
    %9 = vector.shape_cast %8 : vector<128xf32> to vector<1x128xf32>
    %10 = vector.broadcast %9 : vector<1x128xf32> to vector<8x128xf32>
    %11 = arith.cmpf oeq, %6, %10 : vector<8x128xf32>
    %c8_i32 = arith.constant 8 : i32
    %12 = vector.broadcast %c8_i32 : i32 to vector<8x128xi32>
    %13 = arith.select %11, %7, %12 : vector<8x128xi1>, vector<8x128xi32>
    %cst_6 = arith.constant dense<2147483647> : vector<128xi32>
    %14 = vector.multi_reduction <minsi>, %13, %cst_6 [0] : vector<8x128xi32> to vector<128xi32>
    %15 = vector.shape_cast %14 : vector<128xi32> to vector<1x128xi32>
    %16 = vector.broadcast %15 : vector<1x128xi32> to vector<8x128xi32>
    %17 = arith.cmpi eq, %7, %16 : vector<8x128xi32>
    %cst_7 = arith.constant 0xFF800000 : f32
    %18 = vector.broadcast %cst_7 : f32 to vector<8x128xf32>
    %19 = arith.select %17, %18, %6 : vector<8x128xi1>, vector<8x128xf32>
    %cst_8 = arith.constant dense<0xFF800000> : vector<128xf32>
    %20 = vector.multi_reduction <maximumf>, %19, %cst_8 [0] : vector<8x128xf32> to vector<128xf32>
    %21 = vector.shape_cast %20 : vector<128xf32> to vector<1x128xf32>
    %22 = vector.broadcast %21 : vector<1x128xf32> to vector<8x128xf32>
    %23 = arith.cmpf oeq, %19, %22 : vector<8x128xf32>
    %c8_i32_9 = arith.constant 8 : i32
    %24 = vector.broadcast %c8_i32_9 : i32 to vector<8x128xi32>
    %25 = arith.select %23, %7, %24 : vector<8x128xi1>, vector<8x128xi32>
    %cst_10 = arith.constant dense<2147483647> : vector<128xi32>
    %26 = vector.multi_reduction <minsi>, %25, %cst_10 [0] : vector<8x128xi32> to vector<128xi32>
    %27 = vector.shape_cast %26 : vector<128xi32> to vector<1x128xi32>
    %28 = tpu.concatenate %9, %21 in 0 : vector<1x128xf32>, vector<1x128xf32> -> vector<2x128xf32>
    %29 = vector.broadcast %9 : vector<1x128xf32> to vector<2x128xf32>
    %30 = arith.subf %28, %29 : vector<2x128xf32>
    %31 = math.exp %30 : vector<2x128xf32>
    %cst_11 = arith.constant dense<0.000000e+00> : vector<128xf32>
    %32 = vector.multi_reduction <add>, %31, %cst_11 [0] : vector<2x128xf32> to vector<128xf32>
    %33 = vector.shape_cast %32 : vector<128xf32> to vector<1x128xf32>
    %34 = vector.broadcast %33 : vector<1x128xf32> to vector<2x128xf32>
    %35 = arith.divf %31, %34 : vector<2x128xf32>
    %cst_12 = arith.constant 0.000000e+00 : f32
    %36 = vector.broadcast %cst_12 : f32 to vector<8x128xf32>
    %37 = vector.broadcast %15 : vector<1x128xi32> to vector<8x128xi32>
    %38 = arith.cmpi eq, %7, %37 : vector<8x128xi32>
    %39 = vector.extract_strided_slice %35 {offsets = [0, 0], sizes = [1, 128], strides = [1, 1]} : vector<2x128xf32> to vector<1x128xf32>
    %40 = vector.shape_cast %39 : vector<1x128xf32> to vector<1x128xf32>
    %41 = vector.broadcast %40 : vector<1x128xf32> to vector<8x128xf32>
    %42 = arith.select %38, %41, %36 : vector<8x128xi1>, vector<8x128xf32>
    %43 = vector.broadcast %27 : vector<1x128xi32> to vector<8x128xi32>
    %44 = arith.cmpi eq, %7, %43 : vector<8x128xi32>
    %45 = vector.extract_strided_slice %35 {offsets = [1, 0], sizes = [1, 128], strides = [1, 1]} : vector<2x128xf32> to vector<1x128xf32>
    %46 = vector.shape_cast %45 : vector<1x128xf32> to vector<1x128xf32>
    %47 = vector.broadcast %46 : vector<1x128xf32> to vector<8x128xf32>
    %48 = arith.select %44, %47, %42 : vector<8x128xi1>, vector<8x128xf32>
    %c0_13 = arith.constant 0 : index
    %c0_14 = arith.constant 0 : index
    %49 = vector.load %arg4[%c0_13, %c0_14] : memref<8x128xf32, #tpu.memory_space<vmem>>, vector<8x128xf32>
    tpu.vector_store %arg4[%c0_13, %c0_14], %48 {strides = array<i32>} : memref<8x128xf32, #tpu.memory_space<vmem>>, vector<8x128xf32>,
    %50 = tpu.concatenate %15, %27 in 0 : vector<1x128xi32>, vector<1x128xi32> -> vector<2x128xi32>
    %c0_15 = arith.constant 0 : index
    %c0_16 = arith.constant 0 : index
    %51 = vector.load %arg5[%c0_15, %c0_16] : memref<2x128xi32, #tpu.memory_space<vmem>>, vector<2x128xi32>
    tpu.vector_store %arg5[%c0_15, %c0_16], %50 {strides = array<i32>} : memref<2x128xi32, #tpu.memory_space<vmem>>, vector<2x128xi32>,
    return
  }
  func.func @transform_0(%arg0: i32) -> (i32, i32) {
    %c0_i32 = arith.constant 0 : i32
    %c0_i32_0 = arith.constant 0 : i32
    return %arg0, %c0_i32 : i32, i32
  }
  func.func @transform_1(%arg0: i32) -> (i32, i32) {
    %c0_i32 = arith.constant 0 : i32
    %c0_i32_0 = arith.constant 0 : i32
    %c0_i32_1 = arith.constant 0 : i32
    return %c0_i32, %c0_i32_0 : i32, i32
  }
  func.func @transform_2(%arg0: i32) -> (i32, i32) {
    %c0_i32 = arith.constant 0 : i32
    %c0_i32_0 = arith.constant 0 : i32
    %c0_i32_1 = arith.constant 0 : i32
    return %c0_i32, %c0_i32_0 : i32, i32
  }
  func.func @transform_3(%arg0: i32) -> (i32, i32) {
    %c0_i32 = arith.constant 0 : i32
    %c0_i32_0 = arith.constant 0 : i32
    return %c0_i32, %arg0 : i32, i32
  }
  func.func @transform_4(%arg0: i32) -> (i32, i32) {
    %c0_i32 = arith.constant 0 : i32
    %c0_i32_0 = arith.constant 0 : i32
    return %c0_i32, %arg0 : i32, i32
  }
}

</mosaic_0001>

<llo_original>
// kernel: tpu_custom_call.1
$region0: #{tpu_custom_call.1}
  #allocation0 [shape = 'u32[]', space=smem, size = 0x4, offset = 0x4, fixed_abs, tag = 'smem constant byte address 0x4 - core index']
  #allocation1 [shape = 'u32[144,128]{1,0:T(1,128)}', space=vmem, size = 0x12000, scoped, tag = 'internal scratch']
  %s0 = inlined_call_operand.vmem [shape: f32[128,32], index: 0, kind: input, shape index: {}]
  %s1 = inlined_call_operand.vmem [shape: f32[32,8], index: 1, kind: input, shape index: {}]
  %s2 = inlined_call_operand.vmem [shape: f32[8,1], index: 2, kind: input, shape index: {}]
  %s3 = inlined_call_operand.hbm [shape: f32[8,128], index: 3, kind: output, shape index: {0}]
  %s4 = inlined_call_operand.hbm [shape: s32[2,128], index: 4, kind: output, shape index: {1}]
  %5 = xla_tuple %s3, %s4
  %s6 = sld [smem:[#allocation0]]
  $region30: #{tpu_custom_call.1} parent=0
    _
  %s8 = ssub.s32 1, %s6
  %s9 = scalar_select 0, %s8, %s6
  $region1: #{tpu_custom_call.1} parent=0
    #allocation2 [shape = 'u8[4096]{0}', space=vmem, size = 0x1000, scoped, tag = 'output window, operand 0, single buffered']
    #allocation3 [shape = 's32[1]{0}', space=sflag, size = 0x4, scoped, tag = 'scoped memory for tpu_custom_call.1']
    #allocation4 [shape = 'u8[1024]{0}', space=vmem, size = 0x400, scoped, tag = 'output window, operand 1, single buffered']
    #allocation5 [shape = 's32[1]{0}', space=sflag, size = 0x4, scoped, tag = 'scoped memory for tpu_custom_call.1']
    %10 = vsyncpa [#allocation3], 0
    %11 = vsyncpa [#allocation5], 0
    // Predicated region
    $region2: #{tpu_custom_call.1} parent=1 // pred_check
      _
    $region3: #{tpu_custom_call.1} parent=1 // pred_check_branch
      %13 = sbr.rel (0) target = $region5
    $region4: #{tpu_custom_call.1} parent=1 // pred_region
      _
    $region5: #{tpu_custom_call.1} parent=1 // pred_fallthru
      _
    // Predicated region
    $region6: #{tpu_custom_call.1} parent=1 // pred_check
      _
    $region7: #{tpu_custom_call.1} parent=1 // pred_check_branch
      %15 = sbr.rel (0) target = $region9
    $region8: #{tpu_custom_call.1} parent=1 // pred_region
      _
    $region9: #{tpu_custom_call.1} parent=1 // pred_fallthru
      _
    // Predicated region
    $region10: #{tpu_custom_call.1} parent=1 // pred_check
      _
    $region11: #{tpu_custom_call.1} parent=1 // pred_check_branch
      %17 = sbr.rel (0) target = $region13
    $region12: #{tpu_custom_call.1} parent=1 // pred_region
      _
    $region13: #{tpu_custom_call.1} parent=1 // pred_fallthru
      _
    %v18 = vld [vmem:[%s0] sm:$0xff]
    %v19 = vld [vmem:[%s0 + $0x8] sm:$0xff]
    %v20 = vld [vmem:[%s0 + $0x10] sm:$0xff]
    %v21 = vld [vmem:[%s0 + $0x18] sm:$0xff]
    %v22 = vld [vmem:[%s0 + $0x20] sm:$0xff]
    %v23 = vld [vmem:[%s0 + $0x28] sm:$0xff]
    %v24 = vld [vmem:[%s0 + $0x30] sm:$0xff]
    %v25 = vld [vmem:[%s0 + $0x38] sm:$0xff]
    %v26 = vld [vmem:[%s0 + $0x40] sm:$0xff]
    %v27 = vld [vmem:[%s0 + $0x48] sm:$0xff]
    %v28 = vld [vmem:[%s0 + $0x50] sm:$0xff]
    %v29 = vld [vmem:[%s0 + $0x58] sm:$0xff]
    %v30 = vld [vmem:[%s0 + $0x60] sm:$0xff]
    %v31 = vld [vmem:[%s0 + $0x68] sm:$0xff]
    %v32 = vld [vmem:[%s0 + $0x70] sm:$0xff]
    %v33 = vld [vmem:[%s0 + $0x78] sm:$0xff]
    %v34 = vld [vmem:[%s1] sm:$0xff]
    %v35 = vld [vmem:[%s1 + $0x8] sm:$0xff]
    %v36 = vld [vmem:[%s1 + $0x10] sm:$0xff]
    %v37 = vld [vmem:[%s1 + $0x18] sm:$0xff]
    %vm38 = vcmask 261120
    %v40 = vsel %vm38, %v18, 0
    %v43 = vsel %vm38, %v19, 0
    %v46 = vsel %vm38, %v20, 0
    %v49 = vsel %vm38, %v21, 0
    %v52 = vsel %vm38, %v22, 0
    %v55 = vsel %vm38, %v23, 0
    %v58 = vsel %vm38, %v24, 0
    %v61 = vsel %vm38, %v25, 0
    %v64 = vsel %vm38, %v26, 0
    %v67 = vsel %vm38, %v27, 0
    %v70 = vsel %vm38, %v28, 0
    %v73 = vsel %vm38, %v29, 0
    %v76 = vsel %vm38, %v30, 0
    %v79 = vsel %vm38, %v31, 0
    %v82 = vsel %vm38, %v32, 0
    %v85 = vsel %vm38, %v33, 0
    %87 = vmatprep.subr.mxu0 0.0
    %88 = vmatpush1.msra.mxu0 %v34
    %89 = vmatprep.subr.mxu0 0.0
    %90 = vmatpush1.msra.mxu0 %v35
    %91 = vmatprep.subr.mxu0 0.0
    %92 = vmatpush1.msra.mxu0 %v36
    %93 = vmatprep.subr.mxu0 0.0
    %94 = vmatpush1.msra.mxu0 %v37
    %95 = vmatprep.subr.mxu0 0.0
    %96 = vmatpush1.msra.mxu0 0.0
    %97 = vmatprep.subr.mxu0 0.0
    %98 = vmatpush1.msra.mxu0 0.0
    %99 = vmatprep.subr.mxu0 0.0
    %100 = vmatpush1.msra.mxu0 0.0
    %101 = vmatprep.subr.mxu0 0.0
    %102 = vmatpush1.msra.mxu0 0.0
    %103 = vmatprep.subr.mxu0 0.0
    %104 = vmatpush1.msra.mxu0 0.0
    %105 = vmatprep.subr.mxu0 0.0
    %106 = vmatpush1.msra.mxu0 0.0
    %107 = vmatprep.subr.mxu0 0.0
    %108 = vmatpush1.msra.mxu0 0.0
    %109 = vmatprep.subr.mxu0 0.0
    %110 = vmatpush1.msra.mxu0 0.0
    %111 = vmatprep.subr.mxu0 0.0
    %112 = vmatpush1.msra.mxu0 0.0
    %113 = vmatprep.subr.mxu0 0.0
    %114 = vmatpush1.msra.mxu0 0.0
    %115 = vmatprep.subr.mxu0 0.0
    %116 = vmatpush1.msra.mxu0 0.0
    %117 = vmatprep.subr.mxu0 0.0
    %118 = vmatpush1.msra.mxu0 0.0
    %119 = vmatprep.subr.mxu0 0.0
    %120 = vmatpush1.msra.mxu0 0.0
    %121 = vmatprep.subr.mxu0 0.0
    %122 = vmatpush1.msra.mxu0 0.0
    %123 = vmatprep.subr.mxu0 0.0
    %124 = vmatpush1.msra.mxu0 0.0
    %125 = vmatprep.subr.mxu0 0.0
    %126 = vmatpush1.msra.mxu0 0.0
    %127 = vmatprep.subr.mxu0 0.0
    %128 = vmatpush1.msra.mxu0 0.0
    %129 = vmatprep.subr.mxu0 0.0
    %130 = vmatpush1.msra.mxu0 0.0
    %131 = vmatprep.subr.mxu0 0.0
    %132 = vmatpush1.msra.mxu0 0.0
    %133 = vmatprep.subr.mxu0 0.0
    %134 = vmatpush1.msra.mxu0 0.0
    %135 = vmatprep.subr.mxu0 0.0
    %136 = vmatpush1.msra.mxu0 0.0
    %137 = vmatprep.subr.mxu0 0.0
    %138 = vmatpush1.msra.mxu0 0.0
    %139 = vmatprep.subr.mxu0 0.0
    %140 = vmatpush1.msra.mxu0 0.0
    %141 = vmatprep.subr.mxu0 0.0
    %142 = vmatpush1.msra.mxu0 0.0
    %143 = vmatprep.subr.mxu0 0.0
    %144 = vmatpush1.msra.mxu0 0.0
    %145 = vmatprep.subr.mxu0 0.0
    %146 = vmatpush1.msra.mxu0 0.0
    %147 = vmatprep.subr.mxu0 0.0
    %148 = vmatpush1.msra.mxu0 0.0
    %149 = vmatprep.subr.mxu0 0.0
    %150 = vmatpush1.msra.mxu0 0.0
    %151 = vmatprep.mubr.f32.mxu0 0.0
    %152 = vmatmul.mubr.f32.gmra.mrb[0].mxu0 %v40
    %v153 = vpop.f32.mrb[0].mxu0
    %v154 = vadd.f32 0.0, %v153
    %v155 = vpop.f32.mrb[0].mxu0
    %156 = vmatprep.mubr.f32.mxu0 0.0
    %157 = vmatmul.mubr.f32.gmra.mrb[0].mxu0 %v43
    %v158 = vpop.f32.mrb[0].mxu0
    %v159 = vadd.f32 0.0, %v158
    %v160 = vpop.f32.mrb[0].mxu0
    %161 = vmatprep.mubr.f32.mxu0 0.0
    %162 = vmatmul.mubr.f32.gmra.mrb[0].mxu0 %v46
    %v163 = vpop.f32.mrb[0].mxu0
    %v164 = vadd.f32 0.0, %v163
    %v165 = vpop.f32.mrb[0].mxu0
    %166 = vmatprep.mubr.f32.mxu0 0.0
    %167 = vmatmul.mubr.f32.gmra.mrb[0].mxu0 %v49
    %v168 = vpop.f32.mrb[0].mxu0
    %v169 = vadd.f32 0.0, %v168
    %v170 = vpop.f32.mrb[0].mxu0
    %171 = vmatprep.mubr.f32.mxu0 0.0
    %172 = vmatmul.mubr.f32.gmra.mrb[0].mxu0 %v52
    %v173 = vpop.f32.mrb[0].mxu0
    %v174 = vadd.f32 0.0, %v173
    %v175 = vpop.f32.mrb[0].mxu0
    %176 = vmatprep.mubr.f32.mxu0 0.0
    %177 = vmatmul.mubr.f32.gmra.mrb[0].mxu0 %v55
    %v178 = vpop.f32.mrb[0].mxu0
    %v179 = vadd.f32 0.0, %v178
    %v180 = vpop.f32.mrb[0].mxu0
    %181 = vmatprep.mubr.f32.mxu0 0.0
    %182 = vmatmul.mubr.f32.gmra.mrb[0].mxu0 %v58
    %v183 = vpop.f32.mrb[0].mxu0
    %v184 = vadd.f32 0.0, %v183
    %v185 = vpop.f32.mrb[0].mxu0
    %186 = vmatprep.mubr.f32.mxu0 0.0
    %187 = vmatmul.mubr.f32.gmra.mrb[0].mxu0 %v61
    %v188 = vpop.f32.mrb[0].mxu0
    %v189 = vadd.f32 0.0, %v188
    %v190 = vpop.f32.mrb[0].mxu0
    %191 = vmatprep.mubr.f32.mxu0 0.0
    %192 = vmatmul.mubr.f32.gmra.mrb[0].mxu0 %v64
    %v193 = vpop.f32.mrb[0].mxu0
    %v194 = vadd.f32 0.0, %v193
    %v195 = vpop.f32.mrb[0].mxu0
    %196 = vmatprep.mubr.f32.mxu0 0.0
    %197 = vmatmul.mubr.f32.gmra.mrb[0].mxu0 %v67
    %v198 = vpop.f32.mrb[0].mxu0
    %v199 = vadd.f32 0.0, %v198
    %v200 = vpop.f32.mrb[0].mxu0
    %201 = vmatprep.mubr.f32.mxu0 0.0
    %202 = vmatmul.mubr.f32.gmra.mrb[0].mxu0 %v70
    %v203 = vpop.f32.mrb[0].mxu0
    %v204 = vadd.f32 0.0, %v203
    %v205 = vpop.f32.mrb[0].mxu0
    %206 = vmatprep.mubr.f32.mxu0 0.0
    %207 = vmatmul.mubr.f32.gmra.mrb[0].mxu0 %v73
    %v208 = vpop.f32.mrb[0].mxu0
    %v209 = vadd.f32 0.0, %v208
    %v210 = vpop.f32.mrb[0].mxu0
    %211 = vmatprep.mubr.f32.mxu0 0.0
    %212 = vmatmul.mubr.f32.gmra.mrb[0].mxu0 %v76
    %v213 = vpop.f32.mrb[0].mxu0
    %v214 = vadd.f32 0.0, %v213
    %v215 = vpop.f32.mrb[0].mxu0
    %216 = vmatprep.mubr.f32.mxu0 0.0
    %217 = vmatmul.mubr.f32.gmra.mrb[0].mxu0 %v79
    %v218 = vpop.f32.mrb[0].mxu0
    %v219 = vadd.f32 0.0, %v218
    %v220 = vpop.f32.mrb[0].mxu0
    %221 = vmatprep.mubr.f32.mxu0 0.0
    %222 = vmatmul.mubr.f32.gmra.mrb[0].mxu0 %v82
    %v223 = vpop.f32.mrb[0].mxu0
    %v224 = vadd.f32 0.0, %v223
    %v225 = vpop.f32.mrb[0].mxu0
    %226 = vmatprep.mubr.f32.mxu0 0.0
    %227 = vmatmul.mubr.f32.gmra.mrb[0].mxu0 %v85
    %v228 = vpop.f32.mrb[0].mxu0
    %v229 = vadd.f32 0.0, %v228
    %v230 = vpop.f32.mrb[0].mxu0
    %231 = vdwg.mxu0
    %232 = vxpose.xlu0.b32.start [1/16] %v154, 128
    %233 = vxpose.xlu0.b32.cont [2/16] %v159, 128
    %234 = vxpose.xlu0.b32.cont [3/16] %v164, 128
    %235 = vxpose.xlu0.b32.cont [4/16] %v169, 128
    %236 = vxpose.xlu0.b32.cont [5/16] %v174, 128
    %237 = vxpose.xlu0.b32.cont [6/16] %v179, 128
    %238 = vxpose.xlu0.b32.cont [7/16] %v184, 128
    %239 = vxpose.xlu0.b32.cont [8/16] %v189, 128
    %240 = vxpose.xlu0.b32.cont [9/16] %v194, 128
    %241 = vxpose.xlu0.b32.cont [10/16] %v199, 128
    %242 = vxpose.xlu0.b32.cont [11/16] %v204, 128
    %243 = vxpose.xlu0.b32.cont [12/16] %v209, 128
    %244 = vxpose.xlu0.b32.cont [13/16] %v214, 128
    %245 = vxpose.xlu0.b32.cont [14/16] %v219, 128
    %246 = vxpose.xlu0.b32.cont [15/16] %v224, 128
    %247 = vxpose.xlu0.b32.end [16/16] %v229, 128
    %v248 = vpop.trf.xlu0
    %v249 = vpop.trf.xlu0
    %v250 = vpop.trf.xlu0
    %v251 = vpop.trf.xlu0
    %v252 = vpop.trf.xlu0
    %v253 = vpop.trf.xlu0
    %v254 = vpop.trf.xlu0
    %v255 = vpop.trf.xlu0
    %v256 = vpop.trf.xlu0
    %v257 = vpop.trf.xlu0
    %v258 = vpop.trf.xlu0
    %v259 = vpop.trf.xlu0
    %v260 = vpop.trf.xlu0
    %v261 = vpop.trf.xlu0
    %v262 = vpop.trf.xlu0
    %v263 = vpop.trf.xlu0
    %v264 = vld [vmem:[%s2] sm:$0xff]
    %266 = vset.pattern.permute.xlu0 0
    %267 = vperm.xlu0 %266, %v264
    %v268 = vpop.permute.xlu0 %267
    %v270 = vadd.f32 %v248, %v268
    %v271 = vlaneseq
    %v272 = vshrl.u32 %v271, 7
    %v273 = vrot.slane %v270, 4
    %v274 = vmax.f32 %v270, %v273
    %v275 = vrot.slane %v274, 2
    %v276 = vmax.f32 %v274, %v275
    %v277 = vrot.slane %v276, 1
    %v278 = vmax.f32 %v276, %v277
    %vm279 = vcmp.eq.f32.partialorder %v270, %v278
    %v280 = vsel %vm279, %v272, 8
    %v281 = vrot.slane %v280, 4
    %vm282 = vcmp.lt.s32.totalorder %v280, %v281
    %v283 = vsel %vm282, %v280, %v281
    %v284 = vrot.slane %v283, 2
    %vm285 = vcmp.lt.s32.totalorder %v283, %v284
    %v286 = vsel %vm285, %v283, %v284
    %v287 = vrot.slane %v286, 1
    %vm288 = vcmp.lt.s32.totalorder %v286, %v287
    %v289 = vsel %vm288, %v286, %v287
    %vm290 = vcmp.eq.s32.totalorder %v272, %v289
    %v291 = vsel %vm290, -inf, %v270
    %v292 = vrot.slane %v291, 4
    %v293 = vmax.f32 %v291, %v292
    %v294 = vrot.slane %v293, 2
    %v295 = vmax.f32 %v293, %v294
    %v296 = vrot.slane %v295, 1
    %v297 = vmax.f32 %v295, %v296
    %vm298 = vcmp.eq.f32.partialorder %v291, %v297
    %v299 = vsel %vm298, %v272, 8
    %v300 = vrot.slane %v299, 4
    %vm301 = vcmp.lt.s32.totalorder %v299, %v300
    %v302 = vsel %vm301, %v299, %v300
    %v303 = vrot.slane %v302, 2
    %vm304 = vcmp.lt.s32.totalorder %v302, %v303
    %v305 = vsel %vm304, %v302, %v303
    %v306 = vrot.slane %v305, 1
    %vm307 = vcmp.lt.s32.totalorder %v305, %v306
    %v308 = vsel %vm307, %v305, %v306
    %vm309 = vcmask 1040384
    %v310 = vsel %vm309, %v278, %v297
    %v311 = vsub.f32 %v310, %v278
    %v312 = vmul.f32 %v311, 1.442695
    %v313 = vpow.pop %v312
    %vm314 = vcmask 1041408
    %v315 = vsel %vm314, %v313, 0.0
    %v316 = vrot.slane %v315, 4
    %v317 = vadd.f32 %v315, %v316
    %v318 = vrot.slane %v317, 2
    %v319 = vadd.f32 %v317, %v318
    %v320 = vrot.slane %v319, 1
    %v321 = vadd.f32 %v319, %v320
    %v322 = vrcp.pop %v321
    %v323 = vmul.f32 %v313, %v322
    %v324 = vlaneseq
    %v325 = vshrl.u32 %v324, 7
    %v326 = vsub.s32 0, %v325
    %v327 = vrot.slane %v323, %v326
    %v328 = vsel %vm290, %v327, 0.0
    %vm329 = vcmp.eq.s32.totalorder %v272, %v308
    %v330 = vlaneseq
    %v331 = vshrl.u32 %v330, 7
    %v332 = vsub.s32 1, %v331
    %v333 = vrot.slane %v323, %v332
    %v334 = vsel %vm329, %v333, %v328
    %335 = vst [vmem:[#allocation2] sm:$0xff] %v334
    %v336 = vsel %vm309, %v289, %v308
    %337 = vst [vmem:[#allocation4] sm:$0x3] %v336
    // Predicated region
    $region14: #{tpu_custom_call.1} parent=1 // pred_check
      _
    $region15: #{tpu_custom_call.1} parent=1 // pred_check_branch
      %339 = sbr.rel (0) target = $region17
    $region16: #{tpu_custom_call.1} parent=1 // pred_region
      %s341 = ssub.s32 128, 128
      %342 = vsyncadd [#allocation3], %s341
      %s344 = sshll.u32 [#allocation2], 4
      %s345 = int_to_ptr.vmem [resolvable:$true] %s344
      %347 = dma.vmem_to_hbm [thread:$0]  %s345, 128, %s3, [#allocation3]
    $region17: #{tpu_custom_call.1} parent=1 // pred_fallthru
      _
    // Predicated region
    $region18: #{tpu_custom_call.1} parent=1 // pred_check
      _
    $region19: #{tpu_custom_call.1} parent=1 // pred_check_branch
      %349 = sbr.rel (0) target = $region21
    $region20: #{tpu_custom_call.1} parent=1 // pred_region
      %s351 = ssub.s32 32, 32
      %352 = vsyncadd [#allocation5], %s351
      %s354 = sshll.u32 [#allocation4], 4
      %s355 = int_to_ptr.vmem [resolvable:$true] %s354
      %357 = dma.vmem_to_hbm [thread:$0]  %s355, 32, %s4, [#allocation5]
    $region21: #{tpu_custom_call.1} parent=1 // pred_fallthru
      _
    // Predicated region
    $region22: #{tpu_custom_call.1} parent=1 // pred_check
      _
    $region23: #{tpu_custom_call.1} parent=1 // pred_check_branch
      %359 = sbr.rel (0) target = $region25
    $region24: #{tpu_custom_call.1} parent=1 // pred_region
      %360 = dma.done [#allocation3], 128
    $region25: #{tpu_custom_call.1} parent=1 // pred_fallthru
      _
    // Predicated region
    $region26: #{tpu_custom_call.1} parent=1 // pred_check
      _
    $region27: #{tpu_custom_call.1} parent=1 // pred_check_branch
      %362 = sbr.rel (0) target = $region29
    $region28: #{tpu_custom_call.1} parent=1 // pred_region
      %363 = dma.done [#allocation5], 32
    $region29: #{tpu_custom_call.1} parent=1 // pred_fallthru
      _
    %364 = vsyncpa [#allocation3], 1
    %365 = vsyncpa [#allocation5], 1

</llo_original>
